<compile_context>
chip_gen: v7x
topology: tpu7x:2x2x1
jax: 0.10.0
libtpu: 0.0.40
codegen_flags: <defaults>
</compile_context>

<pallas_src>
import functools

import jax
import jax.numpy as jnp
from jax.experimental import pallas as pl
from jax.experimental.pallas import tpu as pltpu


HEADS = 4
HIDDEN = 32
HEAD_DIM = HIDDEN // HEADS
SCALE = HEAD_DIM ** (-0.5)
NEG_LARGE = -1e9  # finite masked bias in f32; exp() underflows cleanly to 0


def mha_kernel(mask_ref, x_ref, wqkv_ref, bqkv_ref, wo_ref, bo_ref, out_ref,
               *, seq_len, heads, head_dim):
    hd = head_dim
    d_model = heads * hd
    mdt = wqkv_ref.dtype                      # MXU operand dtype (weights pre-cast)

    xf = x_ref[...]                           # (M, D), M = block_b * S
    m_rows = xf.shape[0]
    block_b = m_rows // seq_len
    g = heads * block_b                       # independent (head, batch) groups

    # ---- fused QKV projection: one MXU matmul (N = 3*D), f32 accumulate ------
    qkv = jnp.dot(xf.astype(mdt), wqkv_ref[...],
                  preferred_element_type=jnp.float32) + bqkv_ref[...]
    # columns packed [ Q(D) | K(D) | V(D) ]; SCALE already folded into Q columns
    q = qkv[:, 0 * d_model:1 * d_model]
    k = qkv[:, 1 * d_model:2 * d_model]
    v = qkv[:, 2 * d_model:3 * d_model]

    # ---- split heads -> (H*block_b, S, hd); batch stays un-folded -------------
    def split(t):
        th = jnp.stack([t[:, h * hd:(h + 1) * hd] for h in range(heads)], axis=0)
        # (H, M, hd) -> (H*block_b, S, hd): pure leading/sublane-dim reshape,
        # row-major linear order is identical (no permutation).
        return th.reshape(g, seq_len, hd)

    q_g, k_g, v_g = split(q), split(k), split(v)

    # ---- additive key-padding bias per batch element, tiled over heads --------
    bias_b = jnp.where(mask_ref[...] != 0.0, 0.0, NEG_LARGE)           # (block_b,1,S) f32
    bias_g = jnp.broadcast_to(bias_b[None],
                              (heads, block_b, 1, seq_len)).reshape(g, 1, seq_len)

    # ---- attention, batched over (head, batch) groups: scores are (G, S, S) ---
    scores = jnp.einsum("gqd,gkd->gqk", q_g.astype(mdt), k_g.astype(mdt),
                        preferred_element_type=jnp.float32)
    scores = scores + bias_g                                           # f32 mask math

    s_max = jnp.max(scores, axis=-1, keepdims=True)
    e = jnp.exp(scores - s_max)
    denom = jnp.sum(e, axis=-1, keepdims=True)
    attn = e * pl.reciprocal(denom, approx=True)                       # EUP slot
    # dropout(p) on attn: identity (eval mode)

    ctx_g = jnp.einsum("gqk,gkd->gqd", attn.astype(mdt), v_g.astype(mdt),
                       preferred_element_type=jnp.float32)             # (G, S, hd)

    # ---- merge heads + output projection ---------------------------------------
    ctx_h = ctx_g.reshape(heads, m_rows, hd)                           # free reshape
    ctx = jnp.concatenate([ctx_h[h] for h in range(heads)], axis=-1)   # (M, D)
    out = jnp.dot(ctx.astype(mdt), wo_ref[...],
                  preferred_element_type=jnp.float32) + bo_ref[...]
    out_ref[...] = out.astype(out_ref.dtype)


def pack_params(params, mxu_dtype=jnp.bfloat16):
    """One-time parameter transform (outside the per-call path):
    fuse QKV into [Q|K|V] D-wide blocks, fold SCALE into the Q columns/bias,
    cast the matmul weights to the MXU dtype. Biases stay f32."""
    D = params["wq"].shape[0]
    wqkv = jnp.concatenate([params["wq"] * SCALE, params["wk"], params["wv"]],
                           axis=1).astype(mxu_dtype)                   # (D, 3D)
    bqkv = jnp.concatenate([params["bq"] * SCALE, params["bk"], params["bv"]],
                           axis=0).reshape(1, 3 * D).astype(jnp.float32)
    wo = params["wo"].astype(mxu_dtype)
    bo = params["bo"].reshape(1, D).astype(jnp.float32)
    return dict(wqkv=wqkv, bqkv=bqkv, wo=wo, bo=bo)


def multi_head_attention(x, mask, packed, *, block_b=None):
    """x: (B, S, D) f32; mask: (B, 1, 1, S); packed: output of pack_params()."""
    B, S, D = x.shape
    assert D == HIDDEN and D % HEADS == 0

    # >= 2 grid steps whenever B allows it: feeds both v7x TensorCores and
    # overlaps x/out tile DMA with MXU work (v5e has the least HBM bandwidth).
    if block_b is None:
        block_b = B // 2 if (B % 2 == 0 and B >= 2) else B
    assert B % block_b == 0
    nb = B // block_b
    M = block_b * S
    assert (M % 8 == 0) or nb == 1, "block_b * S must be a multiple of 8 sublanes"

    # Wrapper-side layout plumbing (free XLA ops): flatten batch into rows,
    # flatten the padding mask to (B, 1, S).
    xf = x.reshape(B * S, D)
    mask3 = mask.reshape(B, 1, S).astype(jnp.float32)

    kernel = functools.partial(mha_kernel, seq_len=S, heads=HEADS,
                               head_dim=HEAD_DIM)

    const = dict(pipeline_mode=pl.Buffered(1))   # fetched once: single buffer

    out_flat = pl.pallas_call(
        kernel,
        out_shape=jax.ShapeDtypeStruct((B * S, D), x.dtype),
        grid_spec=pltpu.PrefetchScalarGridSpec(
            num_scalar_prefetch=0,
            grid=(nb,),
            in_specs=[
                pl.BlockSpec((block_b, 1, S), lambda i: (i, 0, 0)),       # key mask
                pl.BlockSpec((M, D), lambda i: (i, 0)),                   # x rows
                pl.BlockSpec((D, 3 * D), lambda i: (0, 0), **const),      # fused Wqkv
                pl.BlockSpec((1, 3 * D), lambda i: (0, 0), **const),      # fused bqkv
                pl.BlockSpec((D, D), lambda i: (0, 0), **const),          # Wo
                pl.BlockSpec((1, D), lambda i: (0, 0), **const),          # bo
            ],
            out_specs=pl.BlockSpec((M, D), lambda i: (i, 0)),
        ),
        compiler_params=pltpu.CompilerParams(
            dimension_semantics=("parallel",),
            vmem_limit_bytes=32 * 1024 * 1024,   # explicit budget; re-derive for BERT dims
        ),
    )(mask3, xf, packed["wqkv"], packed["bqkv"], packed["wo"], packed["bo"])

    return out_flat.reshape(B, S, D)


def reference_mha(x, mask, params):
    """Pure-JAX reference mirroring the PyTorch forward semantics."""
    B, S, D = x.shape
    H, hd = HEADS, HEAD_DIM
    q = x @ params["wq"] + params["bq"]
    k = x @ params["wk"] + params["bk"]
    v = x @ params["wv"] + params["bv"]
    q = q.reshape(B, S, H, hd).transpose(0, 2, 1, 3)
    k = k.reshape(B, S, H, hd).transpose(0, 2, 1, 3)
    v = v.reshape(B, S, H, hd).transpose(0, 2, 1, 3)
    scores = jnp.einsum("bhqd,bhkd->bhqk", q, k) * SCALE
    scores = jnp.where(mask == 0, -jnp.inf, scores)
    attn = jax.nn.softmax(scores, axis=-1)
    out = jnp.einsum("bhqk,bhkd->bhqd", attn, v)
    out = out.transpose(0, 2, 1, 3).reshape(B, S, D)
    return out @ params["wo"] + params["bo"]


def init_params(key, hidden):
    keys = jax.random.split(key, 8)
    bound = 1.0 / (hidden ** 0.5)

    def lin(kw, kb):
        w = jax.random.uniform(kw, (hidden, hidden), jnp.float32, -bound, bound)
        b = jax.random.uniform(kb, (hidden,), jnp.float32, -bound, bound)
        return w, b

    wq, bq = lin(keys[0], keys[1])
    wk, bk = lin(keys[2], keys[3])
    wv, bv = lin(keys[4], keys[5])
    wo, bo = lin(keys[6], keys[7])
    return dict(wq=wq, bq=bq, wk=wk, bk=bk, wv=wv, bv=bv, wo=wo, bo=bo)


if __name__ == "__main__":
    B, S, D = 2, 8, HIDDEN
    root = jax.random.PRNGKey(0)
    k_x, k_p = jax.random.split(root)

    x = jax.random.normal(k_x, (B, S, D), jnp.float32)
    # key padding mask: batch 0 fully valid, batch 1 has the last 2 keys padded
    lens = jnp.array([8, 6], dtype=jnp.int32)
    mask = (jnp.arange(S)[None, :] < lens[:, None]).astype(jnp.float32)
    mask = mask.reshape(B, 1, 1, S)

    params = init_params(k_p, D)
    ref = reference_mha(x, mask, params)

    # f32 MXU operands: tight correctness check (tolerance covers approx reciprocal)
    out_f32 = multi_head_attention(x, mask, pack_params(params, jnp.float32))
    out_f32 = jax.block_until_ready(out_f32)
    assert out_f32.shape == (B, S, D)
    assert jnp.allclose(out_f32, ref, atol=5e-3, rtol=5e-3), "f32 kernel mismatch"

    # default path: bf16 MXU operands (native MXU rate on v5e/v6e/v7x)
    out_bf16 = multi_head_attention(x, mask, pack_params(params))
    out_bf16 = jax.block_until_ready(out_bf16)
    assert out_bf16.shape == (B, S, D)
    assert jnp.allclose(out_bf16, ref, atol=3e-2, rtol=3e-2), "bf16 kernel mismatch"

    print("KERNEL_OK")
</pallas_src>

<mosaic_0001>
module attributes {stable_mosaic.version = 11 : i64} {
  func.func @mha_kernel(%arg0: i32, %arg1: memref<1x1x8xf32, #tpu.memory_space<vmem>>, %arg2: memref<8x32xf32, #tpu.memory_space<vmem>>, %arg3: memref<32x96xf32, #tpu.memory_space<vmem>>, %arg4: memref<1x96xf32, #tpu.memory_space<vmem>>, %arg5: memref<32x32xf32, #tpu.memory_space<vmem>>, %arg6: memref<1x32xf32, #tpu.memory_space<vmem>>, %arg7: memref<8x32xf32, #tpu.memory_space<vmem>>) attributes {dimension_semantics = [#tpu.dimension_semantics<parallel>], iteration_bounds = array<i64: 2>, scalar_prefetch = 0 : i64, scratch_operands = 0 : i64, tpu.core_type = #tpu.core_type<tc>, window_params = [{transform_indices = @transform_0, window_bounds = array<i64: 1, 1, 8>}, {transform_indices = @transform_1, window_bounds = array<i64: 8, 32>}, {pipeline_mode = #tpu.pipeline_mode<synchronous>, transform_indices = @transform_2, window_bounds = array<i64: 32, 96>}, {pipeline_mode = #tpu.pipeline_mode<synchronous>, transform_indices = @transform_3, window_bounds = array<i64: 1, 96>}, {pipeline_mode = #tpu.pipeline_mode<synchronous>, transform_indices = @transform_4, window_bounds = array<i64: 32, 32>}, {pipeline_mode = #tpu.pipeline_mode<synchronous>, transform_indices = @transform_5, window_bounds = array<i64: 1, 32>}, {transform_indices = @transform_6, window_bounds = array<i64: 8, 32>}]} {
    %c0 = arith.constant 0 : index
    %c0_0 = arith.constant 0 : index
    %0 = vector.load %arg2[%c0, %c0_0] : memref<8x32xf32, #tpu.memory_space<vmem>>, vector<8x32xf32>
    %c0_1 = arith.constant 0 : index
    %c0_2 = arith.constant 0 : index
    %1 = vector.load %arg3[%c0_1, %c0_2] : memref<32x96xf32, #tpu.memory_space<vmem>>, vector<32x96xf32>
    %cst = arith.constant dense<0.000000e+00> : vector<8x96xf32>
    %2 = tpu.matmul %0, %1, %cst {dimension_numbers = #tpu.dot_dimension_numbers<[1], [0], [0], [1], [0, 0, 1, 1], [], []>} : vector<8x32xf32>, vector<32x96xf32>, vector<8x96xf32> -> vector<8x96xf32>
    %c0_3 = arith.constant 0 : index
    %c0_4 = arith.constant 0 : index
    %3 = vector.load %arg4[%c0_3, %c0_4] : memref<1x96xf32, #tpu.memory_space<vmem>>, vector<1x96xf32>
    %4 = vector.broadcast %3 : vector<1x96xf32> to vector<8x96xf32>
    %5 = arith.addf %2, %4 : vector<8x96xf32>
    %6 = vector.extract_strided_slice %5 {offsets = [0, 0], sizes = [8, 32], strides = [1, 1]} : vector<8x96xf32> to vector<8x32xf32>
    %7 = vector.extract_strided_slice %5 {offsets = [0, 32], sizes = [8, 32], strides = [1, 1]} : vector<8x96xf32> to vector<8x32xf32>
    %8 = vector.extract_strided_slice %5 {offsets = [0, 64], sizes = [8, 32], strides = [1, 1]} : vector<8x96xf32> to vector<8x32xf32>
    %9 = vector.extract_strided_slice %6 {offsets = [0, 0], sizes = [8, 8], strides = [1, 1]} : vector<8x32xf32> to vector<8x8xf32>
    %10 = vector.extract_strided_slice %6 {offsets = [0, 8], sizes = [8, 8], strides = [1, 1]} : vector<8x32xf32> to vector<8x8xf32>
    %11 = vector.extract_strided_slice %6 {offsets = [0, 16], sizes = [8, 8], strides = [1, 1]} : vector<8x32xf32> to vector<8x8xf32>
    %12 = vector.extract_strided_slice %6 {offsets = [0, 24], sizes = [8, 8], strides = [1, 1]} : vector<8x32xf32> to vector<8x8xf32>
    %13 = vector.shape_cast %9 : vector<8x8xf32> to vector<1x8x8xf32>
    %14 = vector.shape_cast %10 : vector<8x8xf32> to vector<1x8x8xf32>
    %15 = vector.shape_cast %11 : vector<8x8xf32> to vector<1x8x8xf32>
    %16 = vector.shape_cast %12 : vector<8x8xf32> to vector<1x8x8xf32>
    %17 = tpu.concatenate %13, %14, %15, %16 in 0 : vector<1x8x8xf32>, vector<1x8x8xf32>, vector<1x8x8xf32>, vector<1x8x8xf32> -> vector<4x8x8xf32>
    %18 = vector.extract_strided_slice %7 {offsets = [0, 0], sizes = [8, 8], strides = [1, 1]} : vector<8x32xf32> to vector<8x8xf32>
    %19 = vector.extract_strided_slice %7 {offsets = [0, 8], sizes = [8, 8], strides = [1, 1]} : vector<8x32xf32> to vector<8x8xf32>
    %20 = vector.extract_strided_slice %7 {offsets = [0, 16], sizes = [8, 8], strides = [1, 1]} : vector<8x32xf32> to vector<8x8xf32>
    %21 = vector.extract_strided_slice %7 {offsets = [0, 24], sizes = [8, 8], strides = [1, 1]} : vector<8x32xf32> to vector<8x8xf32>
    %22 = vector.shape_cast %18 : vector<8x8xf32> to vector<1x8x8xf32>
    %23 = vector.shape_cast %19 : vector<8x8xf32> to vector<1x8x8xf32>
    %24 = vector.shape_cast %20 : vector<8x8xf32> to vector<1x8x8xf32>
    %25 = vector.shape_cast %21 : vector<8x8xf32> to vector<1x8x8xf32>
    %26 = tpu.concatenate %22, %23, %24, %25 in 0 : vector<1x8x8xf32>, vector<1x8x8xf32>, vector<1x8x8xf32>, vector<1x8x8xf32> -> vector<4x8x8xf32>
    %27 = vector.extract_strided_slice %8 {offsets = [0, 0], sizes = [8, 8], strides = [1, 1]} : vector<8x32xf32> to vector<8x8xf32>
    %28 = vector.extract_strided_slice %8 {offsets = [0, 8], sizes = [8, 8], strides = [1, 1]} : vector<8x32xf32> to vector<8x8xf32>
    %29 = vector.extract_strided_slice %8 {offsets = [0, 16], sizes = [8, 8], strides = [1, 1]} : vector<8x32xf32> to vector<8x8xf32>
    %30 = vector.extract_strided_slice %8 {offsets = [0, 24], sizes = [8, 8], strides = [1, 1]} : vector<8x32xf32> to vector<8x8xf32>
    %31 = vector.shape_cast %27 : vector<8x8xf32> to vector<1x8x8xf32>
    %32 = vector.shape_cast %28 : vector<8x8xf32> to vector<1x8x8xf32>
    %33 = vector.shape_cast %29 : vector<8x8xf32> to vector<1x8x8xf32>
    %34 = vector.shape_cast %30 : vector<8x8xf32> to vector<1x8x8xf32>
    %35 = tpu.concatenate %31, %32, %33, %34 in 0 : vector<1x8x8xf32>, vector<1x8x8xf32>, vector<1x8x8xf32>, vector<1x8x8xf32> -> vector<4x8x8xf32>
    %c0_5 = arith.constant 0 : index
    %c0_6 = arith.constant 0 : index
    %c0_7 = arith.constant 0 : index
    %36 = vector.load %arg1[%c0_5, %c0_6, %c0_7] : memref<1x1x8xf32, #tpu.memory_space<vmem>>, vector<1x1x8xf32>
    %cst_8 = arith.constant 0.000000e+00 : f32
    %37 = vector.broadcast %cst_8 : f32 to vector<1x1x8xf32>
    %38 = arith.cmpf one, %36, %37 : vector<1x1x8xf32>
    %cst_9 = arith.constant 0.000000e+00 : f32
    %cst_10 = arith.constant -1.000000e+09 : f32
    %39 = vector.broadcast %cst_9 : f32 to vector<1x1x8xf32>
    %40 = vector.broadcast %cst_10 : f32 to vector<1x1x8xf32>
    %41 = arith.select %38, %39, %40 : vector<1x1x8xi1>, vector<1x1x8xf32>
    %42 = vector.shape_cast %41 : vector<1x1x8xf32> to vector<1x1x1x8xf32>
    %43 = vector.shape_cast %42 : vector<1x1x1x8xf32> to vector<1x1x1x8xf32>
    %44 = vector.broadcast %43 : vector<1x1x1x8xf32> to vector<4x1x1x8xf32>
    %45 = vector.shape_cast %44 : vector<4x1x1x8xf32> to vector<4x1x8xf32>
    "tpu.trace_start"() <{level = 10 : i32, message = "gqd,gkd->gqk"}> : () -> ()
    %cst_11 = arith.constant dense<0.000000e+00> : vector<4x8x8xf32>
    %46 = tpu.matmul %17, %26, %cst_11 {dimension_numbers = #tpu.dot_dimension_numbers<[2], [2], [1], [1], [0, 0, 0, 1, 1, 1], [0], [0]>} : vector<4x8x8xf32>, vector<4x8x8xf32>, vector<4x8x8xf32> -> vector<4x8x8xf32>
    "tpu.trace_stop"() : () -> ()
    %47 = vector.broadcast %45 : vector<4x1x8xf32> to vector<4x8x8xf32>
    %48 = arith.addf %46, %47 : vector<4x8x8xf32>
    %cst_12 = arith.constant dense<0xFF800000> : vector<4x8xf32>
    %49 = vector.multi_reduction <maximumf>, %48, %cst_12 [2] : vector<4x8x8xf32> to vector<4x8xf32>
    %50 = vector.shape_cast %49 : vector<4x8xf32> to vector<4x8x1xf32>
    %51 = vector.broadcast %50 : vector<4x8x1xf32> to vector<4x8x8xf32>
    %52 = arith.subf %48, %51 : vector<4x8x8xf32>
    %53 = math.exp %52 : vector<4x8x8xf32>
    %cst_13 = arith.constant dense<0.000000e+00> : vector<4x8xf32>
    %54 = vector.multi_reduction <add>, %53, %cst_13 [2] : vector<4x8x8xf32> to vector<4x8xf32>
    %55 = vector.shape_cast %54 : vector<4x8xf32> to vector<4x8x1xf32>
    %56 = tpu.reciprocal %55 {approx = true} : vector<4x8x1xf32> -> vector<4x8x1xf32>
    %57 = vector.broadcast %56 : vector<4x8x1xf32> to vector<4x8x8xf32>
    %58 = arith.mulf %53, %57 : vector<4x8x8xf32>
    "tpu.trace_start"() <{level = 10 : i32, message = "gqk,gkd->gqd"}> : () -> ()
    %cst_14 = arith.constant dense<0.000000e+00> : vector<4x8x8xf32>
    %59 = tpu.matmul %58, %35, %cst_14 {dimension_numbers = #tpu.dot_dimension_numbers<[2], [1], [1], [2], [0, 0, 0, 1, 1, 2], [0], [0]>} : vector<4x8x8xf32>, vector<4x8x8xf32>, vector<4x8x8xf32> -> vector<4x8x8xf32>
    "tpu.trace_stop"() : () -> ()
    %60 = vector.extract_strided_slice %59 {offsets = [0, 0, 0], sizes = [1, 8, 8], strides = [1, 1, 1]} : vector<4x8x8xf32> to vector<1x8x8xf32>
    %61 = vector.shape_cast %60 : vector<1x8x8xf32> to vector<8x8xf32>
    %62 = vector.extract_strided_slice %59 {offsets = [1, 0, 0], sizes = [1, 8, 8], strides = [1, 1, 1]} : vector<4x8x8xf32> to vector<1x8x8xf32>
    %63 = vector.shape_cast %62 : vector<1x8x8xf32> to vector<8x8xf32>
    %64 = vector.extract_strided_slice %59 {offsets = [2, 0, 0], sizes = [1, 8, 8], strides = [1, 1, 1]} : vector<4x8x8xf32> to vector<1x8x8xf32>
    %65 = vector.shape_cast %64 : vector<1x8x8xf32> to vector<8x8xf32>
    %66 = vector.extract_strided_slice %59 {offsets = [3, 0, 0], sizes = [1, 8, 8], strides = [1, 1, 1]} : vector<4x8x8xf32> to vector<1x8x8xf32>
    %67 = vector.shape_cast %66 : vector<1x8x8xf32> to vector<8x8xf32>
    %68 = tpu.concatenate %61, %63, %65, %67 in 1 : vector<8x8xf32>, vector<8x8xf32>, vector<8x8xf32>, vector<8x8xf32> -> vector<8x32xf32>
    %c0_15 = arith.constant 0 : index
    %c0_16 = arith.constant 0 : index
    %69 = vector.load %arg5[%c0_15, %c0_16] : memref<32x32xf32, #tpu.memory_space<vmem>>, vector<32x32xf32>
    %cst_17 = arith.constant dense<0.000000e+00> : vector<8x32xf32>
    %70 = tpu.matmul %68, %69, %cst_17 {dimension_numbers = #tpu.dot_dimension_numbers<[1], [0], [0], [1], [0, 0, 1, 1], [], []>} : vector<8x32xf32>, vector<32x32xf32>, vector<8x32xf32> -> vector<8x32xf32>
    %c0_18 = arith.constant 0 : index
    %c0_19 = arith.constant 0 : index
    %71 = vector.load %arg6[%c0_18, %c0_19] : memref<1x32xf32, #tpu.memory_space<vmem>>, vector<1x32xf32>
    %72 = vector.broadcast %71 : vector<1x32xf32> to vector<8x32xf32>
    %73 = arith.addf %70, %72 : vector<8x32xf32>
    %c0_20 = arith.constant 0 : index
    %c0_21 = arith.constant 0 : index
    %74 = vector.load %arg7[%c0_20, %c0_21] : memref<8x32xf32, #tpu.memory_space<vmem>>, vector<8x32xf32>
    tpu.vector_store %arg7[%c0_20, %c0_21], %73 {strides = array<i32>} : memref<8x32xf32, #tpu.memory_space<vmem>>, vector<8x32xf32>,
    return
  }
  func.func @transform_0(%arg0: i32) -> (i32, i32, i32) {
    %c0_i32 = arith.constant 0 : i32
    %c0_i32_0 = arith.constant 0 : i32
    %c0_i32_1 = arith.constant 0 : i32
    return %arg0, %c0_i32, %c0_i32_0 : i32, i32, i32
  }
  func.func @transform_1(%arg0: i32) -> (i32, i32) {
    %c0_i32 = arith.constant 0 : i32
    %c0_i32_0 = arith.constant 0 : i32
    return %arg0, %c0_i32 : i32, i32
  }
  func.func @transform_2(%arg0: i32) -> (i32, i32) {
    %c0_i32 = arith.constant 0 : i32
    %c0_i32_0 = arith.constant 0 : i32
    %c0_i32_1 = arith.constant 0 : i32
    return %c0_i32, %c0_i32_0 : i32, i32
  }
  func.func @transform_3(%arg0: i32) -> (i32, i32) {
    %c0_i32 = arith.constant 0 : i32
    %c0_i32_0 = arith.constant 0 : i32
    %c0_i32_1 = arith.constant 0 : i32
    return %c0_i32, %c0_i32_0 : i32, i32
  }
  func.func @transform_4(%arg0: i32) -> (i32, i32) {
    %c0_i32 = arith.constant 0 : i32
    %c0_i32_0 = arith.constant 0 : i32
    %c0_i32_1 = arith.constant 0 : i32
    return %c0_i32, %c0_i32_0 : i32, i32
  }
  func.func @transform_5(%arg0: i32) -> (i32, i32) {
    %c0_i32 = arith.constant 0 : i32
    %c0_i32_0 = arith.constant 0 : i32
    %c0_i32_1 = arith.constant 0 : i32
    return %c0_i32, %c0_i32_0 : i32, i32
  }
  func.func @transform_6(%arg0: i32) -> (i32, i32) {
    %c0_i32 = arith.constant 0 : i32
    %c0_i32_0 = arith.constant 0 : i32
    return %arg0, %c0_i32 : i32, i32
  }
}

</mosaic_0001>

<llo_original>
// kernel: tpu_custom_call.1
$region0: #{tpu_custom_call.1}
  #allocation0 [shape = 'u32[]', space=smem, size = 0x4, offset = 0x4, fixed_abs, tag = 'smem constant byte address 0x4 - core index']
  #allocation1 [shape = 'u32[144,128]{1,0:T(1,128)}', space=vmem, size = 0x12000, scoped, tag = 'internal scratch']
  %s0 = inlined_call_operand.hbm [shape: f32[2,1,8], index: 0, kind: input, shape index: {}]
  %s1 = inlined_call_operand.hbm [shape: f32[16,32], index: 1, kind: input, shape index: {}]
  %s2 = inlined_call_operand.hbm [shape: f32[32,96], index: 2, kind: input, shape index: {}]
  %s3 = inlined_call_operand.vmem [shape: f32[1,96], index: 3, kind: input, shape index: {}]
  %s4 = inlined_call_operand.hbm [shape: f32[32,32], index: 4, kind: input, shape index: {}]
  %s5 = inlined_call_operand.vmem [shape: f32[1,32], index: 5, kind: input, shape index: {}]
  %s6 = inlined_call_operand.hbm [shape: f32[16,32], index: 6, kind: output, shape index: {}]
  %s7 = sld [smem:[#allocation0]]
  $region73: #{tpu_custom_call.1} parent=0
    _
  %s9 = ssub.s32 1, %s7
  %s10 = scalar_select 0, %s9, %s7
  $region1: #{tpu_custom_call.1} parent=0
    #allocation2 [shape = 'u8[1024]{0}', space=vmem, size = 0x400, scoped, tag = 'input window, operand 0']
    #allocation3 [shape = 's32[2]{0}', space=sflag, size = 0x8, scoped, tag = 'scoped memory for tpu_custom_call.1']
    #allocation4 [shape = 's32[2]{0}', space=sflag, size = 0x8, scoped, tag = 'scoped memory for tpu_custom_call.1']
    #allocation5 [shape = 'u8[8192]{0}', space=vmem, size = 0x2000, scoped, tag = 'input window, operand 1']
    #allocation6 [shape = 's32[2]{0}', space=sflag, size = 0x8, scoped, tag = 'scoped memory for tpu_custom_call.1']
    #allocation7 [shape = 'u8[16384]{0}', space=vmem, size = 0x4000, scoped, tag = 'input window, operand 2, single buffered']
    #allocation8 [shape = 'u8[16384]{0}', space=vmem, size = 0x4000, scoped, tag = 'input window, operand 4, single buffered']
    #allocation9 [shape = 's32[1]{0}', space=sflag, size = 0x4, scoped, tag = 'scoped memory for tpu_custom_call.1']
    #allocation10 [shape = 'u8[8192]{0}', space=vmem, size = 0x2000, scoped, tag = 'output window, operand 0']
    %11 = vsyncpa [#allocation3], 0
    %s12 = scalar_lea.sflag [#allocation3], 1
    %13 = vsyncpa %s12, 0
    %14 = vsyncpa [#allocation6], 0
    %s15 = scalar_lea.sflag [#allocation6], 1
    %16 = vsyncpa %s15, 0
    %17 = vsyncpa [#allocation9], 0
    %18 = vsyncpa [#allocation4], 0
    %s19 = scalar_lea.sflag [#allocation4], 1
    %20 = vsyncpa %s19, 0
    loop: start=0, step=1, limit=4
    $region2: #{tpu_custom_call.1} parent=1 // loop_pre_header
      _
    $region3: #{tpu_custom_call.1} parent=1 // loop_header
      %s22 = sphi 0, %s26
      %p23 = scmp.ge.s32.totalorder %s22, 4
      %s32 = sphi 0, %s34
      %s35 = sphi 0, %s32
      %s36 = sphi 0, %s35
      %s52 = sphi 0, %s36
      %s58 = sphi 0, %s60
      %s61 = sphi 0, %s58
      %s62 = sphi 0, %s61
      %s78 = sphi 0, %s62
      %s82 = sphi 0, %s82
      %s84 = sphi 0, %s82
      %s85 = sphi 0, %s84
      %s99 = sphi 0, %s85
      %s103 = sphi 0, %s103
      %s105 = sphi 0, %s103
      %s106 = sphi 0, %s105
      %s120 = sphi 0, %s106
      %s124 = sphi 0, %s124
      %s126 = sphi 0, %s124
      %s127 = sphi 0, %s126
      %s141 = sphi 0, %s127
      %s145 = sphi 0, %s145
      %s147 = sphi 0, %s145
      %s148 = sphi 0, %s147
      %s162 = sphi 0, %s148
      %s168 = sphi 0, %s170
      %s171 = sphi 0, %s168
      %s172 = sphi 0, %s171
      %s188 = sphi 0, %s172
    $region4: #{tpu_custom_call.1} parent=1 // loop_header_branch
      %25 = sbr.rel (%p23) target = $region8
    $region5: #{tpu_custom_call.1} parent=1 // loop_body
      %s27 = ssub.s32 %s22, 1
      %s28 = ssub.s32 %s22, 2
      %s29 = sadd.s32 %s22, 1
      %s30 = ssub.s32 %s22, %s29
      %p31 = scmp.eq.s32.totalorder %s30, 0
      %s33 = sadd.s32 %s32, 1
      %s34 = scalar_select %p31, %s32, %s33
      %p37 = pneg %p31
      %p38 = scmp.eq.s32.totalorder %s22, 1
      %p39 = por %p37, %p38
      %p40 = scmp.ne.s32.totalorder %s32, %s35
      %p41 = scmp.eq.s32.totalorder %s22, 0
      %p42 = por %p40, %p41
      %p43 = scmp.ne.s32.totalorder %s32, %s35
      %p44 = scmp.eq.s32.totalorder %s27, 1
      %p45 = por %p43, %p44
      %p46 = scmp.ne.s32.totalorder %s35, %s36
      %p47 = scmp.eq.s32.totalorder %s27, 0
      %p48 = por %p46, %p47
      %p49 = scmp.ne.s32.totalorder %s35, %s36
      %p50 = scmp.eq.s32.totalorder %s28, 1
      %p51 = por %p49, %p50
      %p53 = scmp.ne.s32.totalorder %s36, %s52
      %p54 = scmp.eq.s32.totalorder %s28, 0
      %p55 = por %p53, %p54
      %s56 = ssub.s32 %s22, %s29
      %p57 = scmp.eq.s32.totalorder %s56, 0
      %s59 = sadd.s32 %s58, 1
      %s60 = scalar_select %p57, %s58, %s59
      %p63 = pneg %p57
      %p64 = scmp.eq.s32.totalorder %s22, 1
      %p65 = por %p63, %p64
      %p66 = scmp.ne.s32.totalorder %s58, %s61
      %p67 = scmp.eq.s32.totalorder %s22, 0
      %p68 = por %p66, %p67
      %p69 = scmp.ne.s32.totalorder %s58, %s61
      %p70 = scmp.eq.s32.totalorder %s27, 1
      %p71 = por %p69, %p70
      %p72 = scmp.ne.s32.totalorder %s61, %s62
      %p73 = scmp.eq.s32.totalorder %s27, 0
      %p74 = por %p72, %p73
      %p75 = scmp.ne.s32.totalorder %s61, %s62
      %p76 = scmp.eq.s32.totalorder %s28, 1
      %p77 = por %p75, %p76
      %p79 = scmp.ne.s32.totalorder %s62, %s78
      %p80 = scmp.eq.s32.totalorder %s28, 0
      %p81 = por %p79, %p80
      %s83 = sadd.s32 %s82, 1
      %p86 = scmp.eq.s32.totalorder %s22, 1
      %p87 = scmp.ne.s32.totalorder %s82, %s84
      %p88 = scmp.eq.s32.totalorder %s22, 0
      %p89 = por %p87, %p88
      %p90 = scmp.ne.s32.totalorder %s82, %s84
      %p91 = scmp.eq.s32.totalorder %s27, 1
      %p92 = por %p90, %p91
      %p93 = scmp.ne.s32.totalorder %s84, %s85
      %p94 = scmp.eq.s32.totalorder %s27, 0
      %p95 = por %p93, %p94
      %p96 = scmp.ne.s32.totalorder %s84, %s85
      %p97 = scmp.eq.s32.totalorder %s28, 1
      %p98 = por %p96, %p97
      %p100 = scmp.ne.s32.totalorder %s85, %s99
      %p101 = scmp.eq.s32.totalorder %s28, 0
      %p102 = por %p100, %p101
      %s104 = sadd.s32 %s103, 1
      %p107 = scmp.eq.s32.totalorder %s22, 1
      %p108 = scmp.ne.s32.totalorder %s103, %s105
      %p109 = scmp.eq.s32.totalorder %s22, 0
      %p110 = por %p108, %p109
      %p111 = scmp.ne.s32.totalorder %s103, %s105
      %p112 = scmp.eq.s32.totalorder %s27, 1
      %p113 = por %p111, %p112
      %p114 = scmp.ne.s32.totalorder %s105, %s106
      %p115 = scmp.eq.s32.totalorder %s27, 0
      %p116 = por %p114, %p115
      %p117 = scmp.ne.s32.totalorder %s105, %s106
      %p118 = scmp.eq.s32.totalorder %s28, 1
      %p119 = por %p117, %p118
      %p121 = scmp.ne.s32.totalorder %s106, %s120
      %p122 = scmp.eq.s32.totalorder %s28, 0
      %p123 = por %p121, %p122
      %s125 = sadd.s32 %s124, 1
      %p128 = scmp.eq.s32.totalorder %s22, 1
      %p129 = scmp.ne.s32.totalorder %s124, %s126
      %p130 = scmp.eq.s32.totalorder %s22, 0
      %p131 = por %p129, %p130
      %p132 = scmp.ne.s32.totalorder %s124, %s126
      %p133 = scmp.eq.s32.totalorder %s27, 1
      %p134 = por %p132, %p133
      %p135 = scmp.ne.s32.totalorder %s126, %s127
      %p136 = scmp.eq.s32.totalorder %s27, 0
      %p137 = por %p135, %p136
      %p138 = scmp.ne.s32.totalorder %s126, %s127
      %p139 = scmp.eq.s32.totalorder %s28, 1
      %p140 = por %p138, %p139
      %p142 = scmp.ne.s32.totalorder %s127, %s141
      %p143 = scmp.eq.s32.totalorder %s28, 0
      %p144 = por %p142, %p143
      %s146 = sadd.s32 %s145, 1
      %p149 = scmp.eq.s32.totalorder %s22, 1
      %p150 = scmp.ne.s32.totalorder %s145, %s147
      %p151 = scmp.eq.s32.totalorder %s22, 0
      %p152 = por %p150, %p151
      %p153 = scmp.ne.s32.totalorder %s145, %s147
      %p154 = scmp.eq.s32.totalorder %s27, 1
      %p155 = por %p153, %p154
      %p156 = scmp.ne.s32.totalorder %s147, %s148
      %p157 = scmp.eq.s32.totalorder %s27, 0
      %p158 = por %p156, %p157
      %p159 = scmp.ne.s32.totalorder %s147, %s148
      %p160 = scmp.eq.s32.totalorder %s28, 1
      %p161 = por %p159, %p160
      %p163 = scmp.ne.s32.totalorder %s148, %s162
      %p164 = scmp.eq.s32.totalorder %s28, 0
      %p165 = por %p163, %p164
      %s166 = ssub.s32 %s22, %s29
      %p167 = scmp.eq.s32.totalorder %s166, 0
      %s169 = sadd.s32 %s168, 1
      %s170 = scalar_select %p167, %s168, %s169
      %p173 = pneg %p167
      %p174 = scmp.eq.s32.totalorder %s22, 1
      %p175 = por %p173, %p174
      %p176 = scmp.ne.s32.totalorder %s168, %s171
      %p177 = scmp.eq.s32.totalorder %s22, 0
      %p178 = por %p176, %p177
      %p179 = scmp.ne.s32.totalorder %s168, %s171
      %p180 = scmp.eq.s32.totalorder %s27, 1
      %p181 = por %p179, %p180
      %p182 = scmp.ne.s32.totalorder %s171, %s172
      %p183 = scmp.eq.s32.totalorder %s27, 0
      %p184 = por %p182, %p183
      %p185 = scmp.ne.s32.totalorder %s171, %s172
      %p186 = scmp.eq.s32.totalorder %s28, 1
      %p187 = por %p185, %p186
      %p189 = scmp.ne.s32.totalorder %s172, %s188
      %p190 = scmp.eq.s32.totalorder %s28, 0
      %p191 = por %p189, %p190
      %p192 = scmp.le.s32.totalorder 1, %s22
      %p193 = scmp.lt.s32.totalorder %s22, 3
      %p194 = pnand %p192, %p193
      %p195 = pneg %p194
      // Predicated region
      $region9: #{tpu_custom_call.1} parent=5 // pred_check
        _
      $region10: #{tpu_custom_call.1} parent=5 // pred_check_branch
        %197 = sbr.rel (%p194) target = $region12
      $region11: #{tpu_custom_call.1} parent=5 // pred_region
        %s198 = ssub.s32 %s22, 1
        // Predicated region
        $region13: #{tpu_custom_call.1} parent=11 // pred_check
          %p199 = pneg %p95
        $region14: #{tpu_custom_call.1} parent=11 // pred_check_branch
          %201 = sbr.rel (%p199) target = $region16
        $region15: #{tpu_custom_call.1} parent=11 // pred_region
          %s203 = ssub.s32 512, 512
          %204 = vsyncadd [#allocation6], %s203
          %s205 = sshll.u32 [#allocation7], 4
          %s206 = int_to_ptr.vmem [resolvable:$true] %s205
          %211 = dma.hbm_to_vmem [thread:$0]  %s2, 512, %s206, [#allocation6], 128, 128, 8
        $region16: #{tpu_custom_call.1} parent=11 // pred_fallthru
          _
        // Predicated region
        $region17: #{tpu_custom_call.1} parent=11 // pred_check
          %p212 = pneg %p116
        $region18: #{tpu_custom_call.1} parent=11 // pred_check_branch
          %214 = sbr.rel (%p212) target = $region20
        $region19: #{tpu_custom_call.1} parent=11 // pred_region
          _
        $region20: #{tpu_custom_call.1} parent=11 // pred_fallthru
          _
        // Predicated region
        $region21: #{tpu_custom_call.1} parent=11 // pred_check
          %p215 = pneg %p137
        $region22: #{tpu_custom_call.1} parent=11 // pred_check_branch
          %217 = sbr.rel (%p215) target = $region24
        $region23: #{tpu_custom_call.1} parent=11 // pred_region
          %s219 = ssub.s32 512, 512
          %220 = vsyncadd [#allocation9], %s219
          %s221 = sshll.u32 [#allocation8], 4
          %s222 = int_to_ptr.vmem [resolvable:$true] %s221
          %227 = dma.hbm_to_vmem [thread:$0]  %s4, 512, %s222, [#allocation9], 128, 128, 8
        $region24: #{tpu_custom_call.1} parent=11 // pred_fallthru
          _
        // Predicated region
        $region25: #{tpu_custom_call.1} parent=11 // pred_check
          %p228 = pneg %p158
        $region26: #{tpu_custom_call.1} parent=11 // pred_check_branch
          %230 = sbr.rel (%p228) target = $region28
        $region27: #{tpu_custom_call.1} parent=11 // pred_region
          _
        $region28: #{tpu_custom_call.1} parent=11 // pred_fallthru
          _
      $region12: #{tpu_custom_call.1} parent=5 // pred_fallthru
        _
      %p231 = scmp.lt.s32.totalorder %s22, 2
      // Predicated region
      $region29: #{tpu_custom_call.1} parent=5 // pred_check
        %p232 = pneg %p231
      $region30: #{tpu_custom_call.1} parent=5 // pred_check_branch
        %234 = sbr.rel (%p232) target = $region32
      $region31: #{tpu_custom_call.1} parent=5 // pred_region
        // Predicated region
        $region33: #{tpu_custom_call.1} parent=31 // pred_check
          %p235 = pneg %p42
        $region34: #{tpu_custom_call.1} parent=31 // pred_check_branch
          %237 = sbr.rel (%p235) target = $region36
        $region35: #{tpu_custom_call.1} parent=31 // pred_region
          %s238 = sand.u32 %s32, 1
          %s239 = scalar_lea.sflag [#allocation3], %s238
          %s240 = sand.u32 %s32, 1
          %s241 = scalar_lea.vmem [#allocation2], %s240
          %s243 = ssub.s32 16, 16
          %244 = vsyncadd %s239, %s243
          %s245 = smul.addr %s22, 16
          %s246 = scalar_lea.hbm %s0, %s245
          %s248 = sshll.u32 %s241, 4
          %s249 = int_to_ptr.vmem [resolvable:$true] %s248
          %251 = dma.hbm_to_vmem [thread:$0]  %s246, 16, %s249, %s239
        $region36: #{tpu_custom_call.1} parent=31 // pred_fallthru
          _
        // Predicated region
        $region37: #{tpu_custom_call.1} parent=31 // pred_check
          %p252 = pneg %p68
        $region38: #{tpu_custom_call.1} parent=31 // pred_check_branch
          %254 = sbr.rel (%p252) target = $region40
        $region39: #{tpu_custom_call.1} parent=31 // pred_region
          %s255 = sand.u32 %s22, 1
          %s256 = scalar_lea.sflag [#allocation6], %s255
          %s257 = sand.u32 %s58, 1
          %s258 = smul.addr %s257, 8
          %s259 = scalar_lea.vmem [#allocation5], %s258
          %s261 = ssub.s32 128, 128
          %262 = vsyncadd %s256, %s261
          %s263 = smul.addr %s22, 128
          %s264 = scalar_lea.hbm %s1, %s263
          %s266 = sshll.u32 %s259, 4
          %s267 = int_to_ptr.vmem [resolvable:$true] %s266
          %269 = dma.hbm_to_vmem [thread:$0]  %s264, 128, %s267, %s256
        $region40: #{tpu_custom_call.1} parent=31 // pred_fallthru
          _
      $region32: #{tpu_custom_call.1} parent=5 // pred_fallthru
        _
      %p270 = scmp.le.s32.totalorder 1, %s22
      %p271 = scmp.lt.s32.totalorder %s22, 3
      %p272 = pnand %p270, %p271
      %p273 = pneg %p272
      // Predicated region
      $region41: #{tpu_custom_call.1} parent=5 // pred_check
        _
      $region42: #{tpu_custom_call.1} parent=5 // pred_check_branch
        %275 = sbr.rel (%p272) target = $region44
      $region43: #{tpu_custom_call.1} parent=5 // pred_region
        %s276 = ssub.s32 %s22, 1
        %s277 = sand.u32 %s35, 1
        %s278 = scalar_lea.sflag [#allocation3], %s277
        %s279 = sand.u32 %s35, 1
        %s280 = scalar_lea.vmem [#allocation2], %s279
        // Predicated region
        $region45: #{tpu_custom_call.1} parent=43 // pred_check
          %p281 = pneg %p48
        $region46: #{tpu_custom_call.1} parent=43 // pred_check_branch
          %283 = sbr.rel (%p281) target = $region48
        $region47: #{tpu_custom_call.1} parent=43 // pred_region
          %284 = dma.done %s278, 16
        $region48: #{tpu_custom_call.1} parent=43 // pred_fallthru
          _
        %s285 = sand.u32 %s27, 1
        %s286 = scalar_lea.sflag [#allocation6], %s285
        %s287 = sand.u32 %s61, 1
        %s288 = smul.addr %s287, 8
        %s289 = scalar_lea.vmem [#allocation5], %s288
        // Predicated region
        $region49: #{tpu_custom_call.1} parent=43 // pred_check
          %p290 = pneg %p74
        $region50: #{tpu_custom_call.1} parent=43 // pred_check_branch
          %292 = sbr.rel (%p290) target = $region52
        $region51: #{tpu_custom_call.1} parent=43 // pred_region
          %293 = dma.done %s286, 128
        $region52: #{tpu_custom_call.1} parent=43 // pred_fallthru
          _
        // Predicated region
        $region53: #{tpu_custom_call.1} parent=43 // pred_check
          %p294 = pneg %p95
        $region54: #{tpu_custom_call.1} parent=43 // pred_check_branch
          %296 = sbr.rel (%p294) target = $region56
        $region55: #{tpu_custom_call.1} parent=43 // pred_region
          %297 = dma.done [#allocation6], 512
        $region56: #{tpu_custom_call.1} parent=43 // pred_fallthru
          _
        // Predicated region
        $region57: #{tpu_custom_call.1} parent=43 // pred_check
          %p298 = pneg %p137
        $region58: #{tpu_custom_call.1} parent=43 // pred_check_branch
          %300 = sbr.rel (%p298) target = $region60
        $region59: #{tpu_custom_call.1} parent=43 // pred_region
          %301 = dma.done [#allocation9], 512
        $region60: #{tpu_custom_call.1} parent=43 // pred_fallthru
          _
        %s302 = sand.u32 %s35, 1
        %s303 = scalar_lea.sflag [#allocation3], %s302
        %s304 = sand.u32 %s35, 1
        %s305 = scalar_lea.vmem [#allocation2], %s304
        %p306 = pneg %p48
        %p307 = pneg %p45
        %s308 = sand.u32 %s27, 1
        %s309 = scalar_lea.sflag [#allocation6], %s308
        %s310 = sand.u32 %s61, 1
        %s311 = smul.addr %s310, 8
        %s312 = scalar_lea.vmem [#allocation5], %s311
        %p313 = pneg %p74
        %p314 = pneg %p71
        %p315 = pneg %p95
        %p316 = pneg %p92
        %p317 = pneg %p116
        %p318 = pneg %p113
        %p319 = pneg %p137
        %p320 = pneg %p134
        %p321 = pneg %p158
        %p322 = pneg %p155
        %p323 = pneg %p184
        %p324 = pneg %p181
        %s325 = sand.u32 %s171, 1
        %s326 = scalar_lea.sflag [#allocation4], %s325
        %s327 = sand.u32 %s171, 1
        %s328 = smul.addr %s327, 8
        %s329 = scalar_lea.vmem [#allocation10], %s328
        %v330 = vld [vmem:[%s289] sm:$0xff]
        %v331 = vld [vmem:[#allocation7] sm:$0xff]
        %v332 = vld [vmem:[#allocation7 + $0x8] sm:$0xff]
        %v333 = vld [vmem:[#allocation7 + $0x10] sm:$0xff]
        %v334 = vld [vmem:[#allocation7 + $0x18] sm:$0xff]
        %v335 = vld [vmem:[%s3] sm:$0x1]
        %v337 = vlaneseq
        %v338 = vshrl.u32 %v337, 7
        %v339 = vsub.s32 0, %v338
        %v340 = vrot.slane %v335, %v339
        %vm342 = vcmask 261120
        %v344 = vsel %vm342, %v330, 0
        %346 = vmatprep.subr.mxu0 0.0
        %347 = vmatpush1.msra.mxu0 %v331
        %348 = vmatprep.subr.mxu0 0.0
        %349 = vmatpush1.msra.mxu0 %v332
        %350 = vmatprep.subr.mxu0 0.0
        %351 = vmatpush1.msra.mxu0 %v333
        %352 = vmatprep.subr.mxu0 0.0
        %353 = vmatpush1.msra.mxu0 %v334
        %354 = vmatprep.subr.mxu0 0.0
        %355 = vmatpush1.msra.mxu0 0.0
        %356 = vmatprep.subr.mxu0 0.0
        %357 = vmatpush1.msra.mxu0 0.0
        %358 = vmatprep.subr.mxu0 0.0
        %359 = vmatpush1.msra.mxu0 0.0
        %360 = vmatprep.subr.mxu0 0.0
        %361 = vmatpush1.msra.mxu0 0.0
        %362 = vmatprep.subr.mxu0 0.0
        %363 = vmatpush1.msra.mxu0 0.0
        %364 = vmatprep.subr.mxu0 0.0
        %365 = vmatpush1.msra.mxu0 0.0
        %366 = vmatprep.subr.mxu0 0.0
        %367 = vmatpush1.msra.mxu0 0.0
        %368 = vmatprep.subr.mxu0 0.0
        %369 = vmatpush1.msra.mxu0 0.0
        %370 = vmatprep.subr.mxu0 0.0
        %371 = vmatpush1.msra.mxu0 0.0
        %372 = vmatprep.subr.mxu0 0.0
        %373 = vmatpush1.msra.mxu0 0.0
        %374 = vmatprep.subr.mxu0 0.0
        %375 = vmatpush1.msra.mxu0 0.0
        %376 = vmatprep.subr.mxu0 0.0
        %377 = vmatpush1.msra.mxu0 0.0
        %378 = vmatprep.subr.mxu0 0.0
        %379 = vmatpush1.msra.mxu0 0.0
        %380 = vmatprep.subr.mxu0 0.0
        %381 = vmatpush1.msra.mxu0 0.0
        %382 = vmatprep.subr.mxu0 0.0
        %383 = vmatpush1.msra.mxu0 0.0
        %384 = vmatprep.subr.mxu0 0.0
        %385 = vmatpush1.msra.mxu0 0.0
        %386 = vmatprep.subr.mxu0 0.0
        %387 = vmatpush1.msra.mxu0 0.0
        %388 = vmatprep.subr.mxu0 0.0
        %389 = vmatpush1.msra.mxu0 0.0
        %390 = vmatprep.subr.mxu0 0.0
        %391 = vmatpush1.msra.mxu0 0.0
        %392 = vmatprep.subr.mxu0 0.0
        %393 = vmatpush1.msra.mxu0 0.0
        %394 = vmatprep.subr.mxu0 0.0
        %395 = vmatpush1.msra.mxu0 0.0
        %396 = vmatprep.subr.mxu0 0.0
        %397 = vmatpush1.msra.mxu0 0.0
        %398 = vmatprep.subr.mxu0 0.0
        %399 = vmatpush1.msra.mxu0 0.0
        %400 = vmatprep.subr.mxu0 0.0
        %401 = vmatpush1.msra.mxu0 0.0
        %402 = vmatprep.subr.mxu0 0.0
        %403 = vmatpush1.msra.mxu0 0.0
        %404 = vmatprep.subr.mxu0 0.0
        %405 = vmatpush1.msra.mxu0 0.0
        %406 = vmatprep.subr.mxu0 0.0
        %407 = vmatpush1.msra.mxu0 0.0
        %408 = vmatprep.subr.mxu0 0.0
        %409 = vmatpush1.msra.mxu0 0.0
        %410 = vmatprep.mubr.f32.mxu0 0.0
        %411 = vmatmul.mubr.f32.gmra.mrb[0].mxu0 %v344
        %v412 = vpop.f32.mrb[0].mxu0
        %v413 = vadd.f32 %v340, %v412
        %v414 = vpop.f32.mrb[0].mxu0
        %415 = vdwg.mxu0
        %417 = vrot.lane.b32.xlu0 %v413, 120
        %v418 = vpop.permute.xlu0 %417
        %419 = vrot.lane.b32.xlu0 %v413, 112
        %v420 = vpop.permute.xlu0 %419
        %421 = vrot.lane.b32.xlu0 %v413, 104
        %v422 = vpop.permute.xlu0 %421
        %v423 = vld [vmem:[%s280] sm:$0x1]
        %vm424 = vcmp.ne.f32.partialorder %v423, 0.0
        %v425 = vsel %vm424, 0.0, -1e+09
        %v427 = vlaneseq
        %v428 = vshrl.u32 %v427, 7
        %v429 = vsub.s32 0, %v428
        %v430 = vrot.slane %v425, %v429
        %432 = vrot.lane.b32.xlu0 %v413, 96
        %v433 = vpop.permute.xlu0 %432
        %vm434 = vcmask 64512
        %v435 = vsel %vm434, %v413, 0
        %v437 = vsel %vm434, %v433, 0
        %439 = vmatprep.subr.mxu0 0.0
        %440 = vmatpush1.xpose.msra.mxu0 %v437
        %441 = vmatprep.subr.mxu0 0.0
        %442 = vmatpush1.xpose.msra.mxu0 0.0
        %443 = vmatprep.subr.mxu0 0.0
        %444 = vmatpush1.xpose.msra.mxu0 0.0
        %445 = vmatprep.subr.mxu0 0.0
        %446 = vmatpush1.xpose.msra.mxu0 0.0
        %447 = vmatprep.subr.mxu0 0.0
        %448 = vmatpush1.xpose.msra.mxu0 0.0
        %449 = vmatprep.subr.mxu0 0.0
        %450 = vmatpush1.xpose.msra.mxu0 0.0
        %451 = vmatprep.subr.mxu0 0.0
        %452 = vmatpush1.xpose.msra.mxu0 0.0
        %453 = vmatprep.subr.mxu0 0.0
        %454 = vmatpush1.xpose.msra.mxu0 0.0
        %455 = vmatprep.subr.mxu0 0.0
        %456 = vmatpush1.xpose.msra.mxu0 0.0
        %457 = vmatprep.subr.mxu0 0.0
        %458 = vmatpush1.xpose.msra.mxu0 0.0
        %459 = vmatprep.subr.mxu0 0.0
        %460 = vmatpush1.xpose.msra.mxu0 0.0
        %461 = vmatprep.subr.mxu0 0.0
        %462 = vmatpush1.xpose.msra.mxu0 0.0
        %463 = vmatprep.subr.mxu0 0.0
        %464 = vmatpush1.xpose.msra.mxu0 0.0
        %465 = vmatprep.subr.mxu0 0.0
        %466 = vmatpush1.xpose.msra.mxu0 0.0
        %467 = vmatprep.subr.mxu0 0.0
        %468 = vmatpush1.xpose.msra.mxu0 0.0
        %469 = vmatprep.subr.mxu0 0.0
        %470 = vmatpush1.xpose.msra.mxu0 0.0
        %471 = vmatprep.subr.mxu0 0.0
        %472 = vmatpush1.xpose.msra.mxu0 0.0
        %473 = vmatprep.subr.mxu0 0.0
        %474 = vmatpush1.xpose.msra.mxu0 0.0
        %475 = vmatprep.subr.mxu0 0.0
        %476 = vmatpush1.xpose.msra.mxu0 0.0
        %477 = vmatprep.subr.mxu0 0.0
        %478 = vmatpush1.xpose.msra.mxu0 0.0
        %479 = vmatprep.subr.mxu0 0.0
        %480 = vmatpush1.xpose.msra.mxu0 0.0
        %481 = vmatprep.subr.mxu0 0.0
        %482 = vmatpush1.xpose.msra.mxu0 0.0
        %483 = vmatprep.subr.mxu0 0.0
        %484 = vmatpush1.xpose.msra.mxu0 0.0
        %485 = vmatprep.subr.mxu0 0.0
        %486 = vmatpush1.xpose.msra.mxu0 0.0
        %487 = vmatprep.subr.mxu0 0.0
        %488 = vmatpush1.xpose.msra.mxu0 0.0
        %489 = vmatprep.subr.mxu0 0.0
        %490 = vmatpush1.xpose.msra.mxu0 0.0
        %491 = vmatprep.subr.mxu0 0.0
        %492 = vmatpush1.xpose.msra.mxu0 0.0
        %493 = vmatprep.subr.mxu0 0.0
        %494 = vmatpush1.xpose.msra.mxu0 0.0
        %495 = vmatprep.subr.mxu0 0.0
        %496 = vmatpush1.xpose.msra.mxu0 0.0
        %497 = vmatprep.subr.mxu0 0.0
        %498 = vmatpush1.xpose.msra.mxu0 0.0
        %499 = vmatprep.subr.mxu0 0.0
        %500 = vmatpush1.xpose.msra.mxu0 0.0
        %501 = vmatprep.subr.mxu0 0.0
        %502 = vmatpush1.xpose.msra.mxu0 0.0
        %503 = vmatprep.mubr.f32.mxu0 0.0
        %504 = vmatmul.mubr.f32.gmra.mrb[0].mxu0 %v435
        %v505 = vpop.f32.mrb[0].mxu0
        %v506 = vadd.f32 %v430, %v505
        %v507 = vpop.f32.mrb[0].mxu0
        %508 = vdwg.mxu0
        %509 = vrot.lane.b32.xlu0 %v418, 96
        %v510 = vpop.permute.xlu0 %509
        %v511 = vsel %vm434, %v418, 0
        %v513 = vsel %vm434, %v510, 0
        %515 = vmatprep.subr.mxu0 0.0
        %516 = vmatpush1.xpose.msra.mxu0 %v513
        %517 = vmatprep.subr.mxu0 0.0
        %518 = vmatpush1.xpose.msra.mxu0 0.0
        %519 = vmatprep.subr.mxu0 0.0
        %520 = vmatpush1.xpose.msra.mxu0 0.0
        %521 = vmatprep.subr.mxu0 0.0
        %522 = vmatpush1.xpose.msra.mxu0 0.0
        %523 = vmatprep.subr.mxu0 0.0
        %524 = vmatpush1.xpose.msra.mxu0 0.0
        %525 = vmatprep.subr.mxu0 0.0
        %526 = vmatpush1.xpose.msra.mxu0 0.0
        %527 = vmatprep.subr.mxu0 0.0
        %528 = vmatpush1.xpose.msra.mxu0 0.0
        %529 = vmatprep.subr.mxu0 0.0
        %530 = vmatpush1.xpose.msra.mxu0 0.0
        %531 = vmatprep.subr.mxu0 0.0
        %532 = vmatpush1.xpose.msra.mxu0 0.0
        %533 = vmatprep.subr.mxu0 0.0
        %534 = vmatpush1.xpose.msra.mxu0 0.0
        %535 = vmatprep.subr.mxu0 0.0
        %536 = vmatpush1.xpose.msra.mxu0 0.0
        %537 = vmatprep.subr.mxu0 0.0
        %538 = vmatpush1.xpose.msra.mxu0 0.0
        %539 = vmatprep.subr.mxu0 0.0
        %540 = vmatpush1.xpose.msra.mxu0 0.0
        %541 = vmatprep.subr.mxu0 0.0
        %542 = vmatpush1.xpose.msra.mxu0 0.0
        %543 = vmatprep.subr.mxu0 0.0
        %544 = vmatpush1.xpose.msra.mxu0 0.0
        %545 = vmatprep.subr.mxu0 0.0
        %546 = vmatpush1.xpose.msra.mxu0 0.0
        %547 = vmatprep.subr.mxu0 0.0
        %548 = vmatpush1.xpose.msra.mxu0 0.0
        %549 = vmatprep.subr.mxu0 0.0
        %550 = vmatpush1.xpose.msra.mxu0 0.0
        %551 = vmatprep.subr.mxu0 0.0
        %552 = vmatpush1.xpose.msra.mxu0 0.0
        %553 = vmatprep.subr.mxu0 0.0
        %554 = vmatpush1.xpose.msra.mxu0 0.0
        %555 = vmatprep.subr.mxu0 0.0
        %556 = vmatpush1.xpose.msra.mxu0 0.0
        %557 = vmatprep.subr.mxu0 0.0
        %558 = vmatpush1.xpose.msra.mxu0 0.0
        %559 = vmatprep.subr.mxu0 0.0
        %560 = vmatpush1.xpose.msra.mxu0 0.0
        %561 = vmatprep.subr.mxu0 0.0
        %562 = vmatpush1.xpose.msra.mxu0 0.0
        %563 = vmatprep.subr.mxu0 0.0
        %564 = vmatpush1.xpose.msra.mxu0 0.0
        %565 = vmatprep.subr.mxu0 0.0
        %566 = vmatpush1.xpose.msra.mxu0 0.0
        %567 = vmatprep.subr.mxu0 0.0
        %568 = vmatpush1.xpose.msra.mxu0 0.0
        %569 = vmatprep.subr.mxu0 0.0
        %570 = vmatpush1.xpose.msra.mxu0 0.0
        %571 = vmatprep.subr.mxu0 0.0
        %572 = vmatpush1.xpose.msra.mxu0 0.0
        %573 = vmatprep.subr.mxu0 0.0
        %574 = vmatpush1.xpose.msra.mxu0 0.0
        %575 = vmatprep.subr.mxu0 0.0
        %576 = vmatpush1.xpose.msra.mxu0 0.0
        %577 = vmatprep.subr.mxu0 0.0
        %578 = vmatpush1.xpose.msra.mxu0 0.0
        %579 = vmatprep.mubr.f32.mxu0 0.0
        %580 = vmatmul.mubr.f32.gmra.mrb[0].mxu0 %v511
        %v581 = vpop.f32.mrb[0].mxu0
        %v582 = vadd.f32 %v430, %v581
        %v583 = vpop.f32.mrb[0].mxu0
        %584 = vdwg.mxu0
        %585 = vrot.lane.b32.xlu0 %v420, 96
        %v586 = vpop.permute.xlu0 %585
        %v587 = vsel %vm434, %v420, 0
        %v589 = vsel %vm434, %v586, 0
        %591 = vmatprep.subr.mxu0 0.0
        %592 = vmatpush1.xpose.msra.mxu0 %v589
        %593 = vmatprep.subr.mxu0 0.0
        %594 = vmatpush1.xpose.msra.mxu0 0.0
        %595 = vmatprep.subr.mxu0 0.0
        %596 = vmatpush1.xpose.msra.mxu0 0.0
        %597 = vmatprep.subr.mxu0 0.0
        %598 = vmatpush1.xpose.msra.mxu0 0.0
        %599 = vmatprep.subr.mxu0 0.0
        %600 = vmatpush1.xpose.msra.mxu0 0.0
        %601 = vmatprep.subr.mxu0 0.0
        %602 = vmatpush1.xpose.msra.mxu0 0.0
        %603 = vmatprep.subr.mxu0 0.0
        %604 = vmatpush1.xpose.msra.mxu0 0.0
        %605 = vmatprep.subr.mxu0 0.0
        %606 = vmatpush1.xpose.msra.mxu0 0.0
        %607 = vmatprep.subr.mxu0 0.0
        %608 = vmatpush1.xpose.msra.mxu0 0.0
        %609 = vmatprep.subr.mxu0 0.0
        %610 = vmatpush1.xpose.msra.mxu0 0.0
        %611 = vmatprep.subr.mxu0 0.0
        %612 = vmatpush1.xpose.msra.mxu0 0.0
        %613 = vmatprep.subr.mxu0 0.0
        %614 = vmatpush1.xpose.msra.mxu0 0.0
        %615 = vmatprep.subr.mxu0 0.0
        %616 = vmatpush1.xpose.msra.mxu0 0.0
        %617 = vmatprep.subr.mxu0 0.0
        %618 = vmatpush1.xpose.msra.mxu0 0.0
        %619 = vmatprep.subr.mxu0 0.0
        %620 = vmatpush1.xpose.msra.mxu0 0.0
        %621 = vmatprep.subr.mxu0 0.0
        %622 = vmatpush1.xpose.msra.mxu0 0.0
        %623 = vmatprep.subr.mxu0 0.0
        %624 = vmatpush1.xpose.msra.mxu0 0.0
        %625 = vmatprep.subr.mxu0 0.0
        %626 = vmatpush1.xpose.msra.mxu0 0.0
        %627 = vmatprep.subr.mxu0 0.0
        %628 = vmatpush1.xpose.msra.mxu0 0.0
        %629 = vmatprep.subr.mxu0 0.0
        %630 = vmatpush1.xpose.msra.mxu0 0.0
        %631 = vmatprep.subr.mxu0 0.0
        %632 = vmatpush1.xpose.msra.mxu0 0.0
        %633 = vmatprep.subr.mxu0 0.0
        %634 = vmatpush1.xpose.msra.mxu0 0.0
        %635 = vmatprep.subr.mxu0 0.0
        %636 = vmatpush1.xpose.msra.mxu0 0.0
        %637 = vmatprep.subr.mxu0 0.0
        %638 = vmatpush1.xpose.msra.mxu0 0.0
        %639 = vmatprep.subr.mxu0 0.0
        %640 = vmatpush1.xpose.msra.mxu0 0.0
        %641 = vmatprep.subr.mxu0 0.0
        %642 = vmatpush1.xpose.msra.mxu0 0.0
        %643 = vmatprep.subr.mxu0 0.0
        %644 = vmatpush1.xpose.msra.mxu0 0.0
        %645 = vmatprep.subr.mxu0 0.0
        %646 = vmatpush1.xpose.msra.mxu0 0.0
        %647 = vmatprep.subr.mxu0 0.0
        %648 = vmatpush1.xpose.msra.mxu0 0.0
        %649 = vmatprep.subr.mxu0 0.0
        %650 = vmatpush1.xpose.msra.mxu0 0.0
        %651 = vmatprep.subr.mxu0 0.0
        %652 = vmatpush1.xpose.msra.mxu0 0.0
        %653 = vmatprep.subr.mxu0 0.0
        %654 = vmatpush1.xpose.msra.mxu0 0.0
        %655 = vmatprep.mubr.f32.mxu0 0.0
        %656 = vmatmul.mubr.f32.gmra.mrb[0].mxu0 %v587
        %v657 = vpop.f32.mrb[0].mxu0
        %v658 = vadd.f32 %v430, %v657
        %v659 = vpop.f32.mrb[0].mxu0
        %660 = vdwg.mxu0
        %661 = vrot.lane.b32.xlu0 %v422, 96
        %v662 = vpop.permute.xlu0 %661
        %v663 = vsel %vm434, %v422, 0
        %v665 = vsel %vm434, %v662, 0
        %667 = vmatprep.subr.mxu0 0.0
        %668 = vmatpush1.xpose.msra.mxu0 %v665
        %669 = vmatprep.subr.mxu0 0.0
        %670 = vmatpush1.xpose.msra.mxu0 0.0
        %671 = vmatprep.subr.mxu0 0.0
        %672 = vmatpush1.xpose.msra.mxu0 0.0
        %673 = vmatprep.subr.mxu0 0.0
        %674 = vmatpush1.xpose.msra.mxu0 0.0
        %675 = vmatprep.subr.mxu0 0.0
        %676 = vmatpush1.xpose.msra.mxu0 0.0
        %677 = vmatprep.subr.mxu0 0.0
        %678 = vmatpush1.xpose.msra.mxu0 0.0
        %679 = vmatprep.subr.mxu0 0.0
        %680 = vmatpush1.xpose.msra.mxu0 0.0
        %681 = vmatprep.subr.mxu0 0.0
        %682 = vmatpush1.xpose.msra.mxu0 0.0
        %683 = vmatprep.subr.mxu0 0.0
        %684 = vmatpush1.xpose.msra.mxu0 0.0
        %685 = vmatprep.subr.mxu0 0.0
        %686 = vmatpush1.xpose.msra.mxu0 0.0
        %687 = vmatprep.subr.mxu0 0.0
        %688 = vmatpush1.xpose.msra.mxu0 0.0
        %689 = vmatprep.subr.mxu0 0.0
        %690 = vmatpush1.xpose.msra.mxu0 0.0
        %691 = vmatprep.subr.mxu0 0.0
        %692 = vmatpush1.xpose.msra.mxu0 0.0
        %693 = vmatprep.subr.mxu0 0.0
        %694 = vmatpush1.xpose.msra.mxu0 0.0
        %695 = vmatprep.subr.mxu0 0.0
        %696 = vmatpush1.xpose.msra.mxu0 0.0
        %697 = vmatprep.subr.mxu0 0.0
        %698 = vmatpush1.xpose.msra.mxu0 0.0
        %699 = vmatprep.subr.mxu0 0.0
        %700 = vmatpush1.xpose.msra.mxu0 0.0
        %701 = vmatprep.subr.mxu0 0.0
        %702 = vmatpush1.xpose.msra.mxu0 0.0
        %703 = vmatprep.subr.mxu0 0.0
        %704 = vmatpush1.xpose.msra.mxu0 0.0
        %705 = vmatprep.subr.mxu0 0.0
        %706 = vmatpush1.xpose.msra.mxu0 0.0
        %707 = vmatprep.subr.mxu0 0.0
        %708 = vmatpush1.xpose.msra.mxu0 0.0
        %709 = vmatprep.subr.mxu0 0.0
        %710 = vmatpush1.xpose.msra.mxu0 0.0
        %711 = vmatprep.subr.mxu0 0.0
        %712 = vmatpush1.xpose.msra.mxu0 0.0
        %713 = vmatprep.subr.mxu0 0.0
        %714 = vmatpush1.xpose.msra.mxu0 0.0
        %715 = vmatprep.subr.mxu0 0.0
        %716 = vmatpush1.xpose.msra.mxu0 0.0
        %717 = vmatprep.subr.mxu0 0.0
        %718 = vmatpush1.xpose.msra.mxu0 0.0
        %719 = vmatprep.subr.mxu0 0.0
        %720 = vmatpush1.xpose.msra.mxu0 0.0
        %721 = vmatprep.subr.mxu0 0.0
        %722 = vmatpush1.xpose.msra.mxu0 0.0
        %723 = vmatprep.subr.mxu0 0.0
        %724 = vmatpush1.xpose.msra.mxu0 0.0
        %725 = vmatprep.subr.mxu0 0.0
        %726 = vmatpush1.xpose.msra.mxu0 0.0
        %727 = vmatprep.subr.mxu0 0.0
        %728 = vmatpush1.xpose.msra.mxu0 0.0
        %729 = vmatprep.subr.mxu0 0.0
        %730 = vmatpush1.xpose.msra.mxu0 0.0
        %731 = vmatprep.mubr.f32.mxu0 0.0
        %732 = vmatmul.mubr.f32.gmra.mrb[0].mxu0 %v663
        %v733 = vpop.f32.mrb[0].mxu0
        %v734 = vadd.f32 %v430, %v733
        %v735 = vpop.f32.mrb[0].mxu0
        %736 = vdwg.mxu0
        %v737 = vsel %vm434, %v506, -inf
        %738 = vmax.xlane.f32.xlu0 %v737
        %v739 = vpop.xlane.xlu0 %738
        %v740 = vsel %vm434, %v582, -inf
        %741 = vmax.xlane.f32.xlu0 %v740
        %v742 = vpop.xlane.xlu0 %741
        %v743 = vsel %vm434, %v658, -inf
        %744 = vmax.xlane.f32.xlu0 %v743
        %v745 = vpop.xlane.xlu0 %744
        %v746 = vsel %vm434, %v734, -inf
        %747 = vmax.xlane.f32.xlu0 %v746
        %v748 = vpop.xlane.xlu0 %747
        %v749 = vsub.f32 %v506, %v739
        %v750 = vsub.f32 %v582, %v742
        %v751 = vsub.f32 %v658, %v745
        %v752 = vsub.f32 %v734, %v748
        %v753 = vmul.f32 %v749, 1.442695
        %v754 = vpow.pop %v753
        %v755 = vmul.f32 %v750, 1.442695
        %v756 = vpow.pop %v755
        %v757 = vmul.f32 %v751, 1.442695
        %v758 = vpow.pop %v757
        %v759 = vmul.f32 %v752, 1.442695
        %v760 = vpow.pop %v759
        %v761 = vsel %vm434, %v754, 0.0
        %762 = vadd.xlane.f32.xlu0 %v761
        %v763 = vpop.xlane.xlu0 %762
        %v764 = vsel %vm434, %v756, 0.0
        %765 = vadd.xlane.f32.xlu0 %v764
        %v766 = vpop.xlane.xlu0 %765
        %v767 = vsel %vm434, %v758, 0.0
        %768 = vadd.xlane.f32.xlu0 %v767
        %v769 = vpop.xlane.xlu0 %768
        %v770 = vsel %vm434, %v760, 0.0
        %771 = vadd.xlane.f32.xlu0 %v770
        %v772 = vpop.xlane.xlu0 %771
        %v773 = vrcp.pop %v763
        %v774 = vrcp.pop %v766
        %v775 = vrcp.pop %v769
        %v776 = vrcp.pop %v772
        %v777 = vmul.f32 %v754, %v773
        %v778 = vmul.f32 %v756, %v774
        %v779 = vmul.f32 %v758, %v775
        %v780 = vmul.f32 %v760, %v776
        %781 = vrot.lane.b32.xlu0 %v413, 64
        %v782 = vpop.permute.xlu0 %781
        %v785 = vsel %vm434, %v777, 0
        %787 = vmatprep.subr.mxu0 0.0
        %788 = vmatpush1.msra.mxu0 %v782
        %789 = vmatprep.subr.mxu0 0.0
        %790 = vmatpush1.msra.mxu0 0.0
        %791 = vmatprep.subr.mxu0 0.0
        %792 = vmatpush1.msra.mxu0 0.0
        %793 = vmatprep.subr.mxu0 0.0
        %794 = vmatpush1.msra.mxu0 0.0
        %795 = vmatprep.subr.mxu0 0.0
        %796 = vmatpush1.msra.mxu0 0.0
        %797 = vmatprep.subr.mxu0 0.0
        %798 = vmatpush1.msra.mxu0 0.0
        %799 = vmatprep.subr.mxu0 0.0
        %800 = vmatpush1.msra.mxu0 0.0
        %801 = vmatprep.subr.mxu0 0.0
        %802 = vmatpush1.msra.mxu0 0.0
        %803 = vmatprep.subr.mxu0 0.0
        %804 = vmatpush1.msra.mxu0 0.0
        %805 = vmatprep.subr.mxu0 0.0
        %806 = vmatpush1.msra.mxu0 0.0
        %807 = vmatprep.subr.mxu0 0.0
        %808 = vmatpush1.msra.mxu0 0.0
        %809 = vmatprep.subr.mxu0 0.0
        %810 = vmatpush1.msra.mxu0 0.0
        %811 = vmatprep.subr.mxu0 0.0
        %812 = vmatpush1.msra.mxu0 0.0
        %813 = vmatprep.subr.mxu0 0.0
        %814 = vmatpush1.msra.mxu0 0.0
        %815 = vmatprep.subr.mxu0 0.0
        %816 = vmatpush1.msra.mxu0 0.0
        %817 = vmatprep.subr.mxu0 0.0
        %818 = vmatpush1.msra.mxu0 0.0
        %819 = vmatprep.subr.mxu0 0.0
        %820 = vmatpush1.msra.mxu0 0.0
        %821 = vmatprep.subr.mxu0 0.0
        %822 = vmatpush1.msra.mxu0 0.0
        %823 = vmatprep.subr.mxu0 0.0
        %824 = vmatpush1.msra.mxu0 0.0
        %825 = vmatprep.subr.mxu0 0.0
        %826 = vmatpush1.msra.mxu0 0.0
        %827 = vmatprep.subr.mxu0 0.0
        %828 = vmatpush1.msra.mxu0 0.0
        %829 = vmatprep.subr.mxu0 0.0
        %830 = vmatpush1.msra.mxu0 0.0
        %831 = vmatprep.subr.mxu0 0.0
        %832 = vmatpush1.msra.mxu0 0.0
        %833 = vmatprep.subr.mxu0 0.0
        %834 = vmatpush1.msra.mxu0 0.0
        %835 = vmatprep.subr.mxu0 0.0
        %836 = vmatpush1.msra.mxu0 0.0
        %837 = vmatprep.subr.mxu0 0.0
        %838 = vmatpush1.msra.mxu0 0.0
        %839 = vmatprep.subr.mxu0 0.0
        %840 = vmatpush1.msra.mxu0 0.0
        %841 = vmatprep.subr.mxu0 0.0
        %842 = vmatpush1.msra.mxu0 0.0
        %843 = vmatprep.subr.mxu0 0.0
        %844 = vmatpush1.msra.mxu0 0.0
        %845 = vmatprep.subr.mxu0 0.0
        %846 = vmatpush1.msra.mxu0 0.0
        %847 = vmatprep.subr.mxu0 0.0
        %848 = vmatpush1.msra.mxu0 0.0
        %849 = vmatprep.subr.mxu0 0.0
        %850 = vmatpush1.msra.mxu0 0.0
        %851 = vmatprep.mubr.f32.mxu0 0.0
        %852 = vmatmul.mubr.f32.gmra.mrb[0].mxu0 %v785
        %v853 = vpop.f32.mrb[0].mxu0
        %v854 = vadd.f32 0.0, %v853
        %v855 = vpop.f32.mrb[0].mxu0
        %856 = vdwg.mxu0
        %857 = vrot.lane.b32.xlu0 %v418, 64
        %v858 = vpop.permute.xlu0 %857
        %v861 = vsel %vm434, %v778, 0
        %863 = vmatprep.subr.mxu0 0.0
        %864 = vmatpush1.msra.mxu0 %v858
        %865 = vmatprep.subr.mxu0 0.0
        %866 = vmatpush1.msra.mxu0 0.0
        %867 = vmatprep.subr.mxu0 0.0
        %868 = vmatpush1.msra.mxu0 0.0
        %869 = vmatprep.subr.mxu0 0.0
        %870 = vmatpush1.msra.mxu0 0.0
        %871 = vmatprep.subr.mxu0 0.0
        %872 = vmatpush1.msra.mxu0 0.0
        %873 = vmatprep.subr.mxu0 0.0
        %874 = vmatpush1.msra.mxu0 0.0
        %875 = vmatprep.subr.mxu0 0.0
        %876 = vmatpush1.msra.mxu0 0.0
        %877 = vmatprep.subr.mxu0 0.0
        %878 = vmatpush1.msra.mxu0 0.0
        %879 = vmatprep.subr.mxu0 0.0
        %880 = vmatpush1.msra.mxu0 0.0
        %881 = vmatprep.subr.mxu0 0.0
        %882 = vmatpush1.msra.mxu0 0.0
        %883 = vmatprep.subr.mxu0 0.0
        %884 = vmatpush1.msra.mxu0 0.0
        %885 = vmatprep.subr.mxu0 0.0
        %886 = vmatpush1.msra.mxu0 0.0
        %887 = vmatprep.subr.mxu0 0.0
        %888 = vmatpush1.msra.mxu0 0.0
        %889 = vmatprep.subr.mxu0 0.0
        %890 = vmatpush1.msra.mxu0 0.0
        %891 = vmatprep.subr.mxu0 0.0
        %892 = vmatpush1.msra.mxu0 0.0
        %893 = vmatprep.subr.mxu0 0.0
        %894 = vmatpush1.msra.mxu0 0.0
        %895 = vmatprep.subr.mxu0 0.0
        %896 = vmatpush1.msra.mxu0 0.0
        %897 = vmatprep.subr.mxu0 0.0
        %898 = vmatpush1.msra.mxu0 0.0
        %899 = vmatprep.subr.mxu0 0.0
        %900 = vmatpush1.msra.mxu0 0.0
        %901 = vmatprep.subr.mxu0 0.0
        %902 = vmatpush1.msra.mxu0 0.0
        %903 = vmatprep.subr.mxu0 0.0
        %904 = vmatpush1.msra.mxu0 0.0
        %905 = vmatprep.subr.mxu0 0.0
        %906 = vmatpush1.msra.mxu0 0.0
        %907 = vmatprep.subr.mxu0 0.0
        %908 = vmatpush1.msra.mxu0 0.0
        %909 = vmatprep.subr.mxu0 0.0
        %910 = vmatpush1.msra.mxu0 0.0
        %911 = vmatprep.subr.mxu0 0.0
        %912 = vmatpush1.msra.mxu0 0.0
        %913 = vmatprep.subr.mxu0 0.0
        %914 = vmatpush1.msra.mxu0 0.0
        %915 = vmatprep.subr.mxu0 0.0
        %916 = vmatpush1.msra.mxu0 0.0
        %917 = vmatprep.subr.mxu0 0.0
        %918 = vmatpush1.msra.mxu0 0.0
        %919 = vmatprep.subr.mxu0 0.0
        %920 = vmatpush1.msra.mxu0 0.0
        %921 = vmatprep.subr.mxu0 0.0
        %922 = vmatpush1.msra.mxu0 0.0
        %923 = vmatprep.subr.mxu0 0.0
        %924 = vmatpush1.msra.mxu0 0.0
        %925 = vmatprep.subr.mxu0 0.0
        %926 = vmatpush1.msra.mxu0 0.0
        %927 = vmatprep.mubr.f32.mxu0 0.0
        %928 = vmatmul.mubr.f32.gmra.mrb[0].mxu0 %v861
        %v929 = vpop.f32.mrb[0].mxu0
        %v930 = vadd.f32 0.0, %v929
        %v931 = vpop.f32.mrb[0].mxu0
        %932 = vdwg.mxu0
        %933 = vrot.lane.b32.xlu0 %v420, 64
        %v934 = vpop.permute.xlu0 %933
        %v937 = vsel %vm434, %v779, 0
        %939 = vmatprep.subr.mxu0 0.0
        %940 = vmatpush1.msra.mxu0 %v934
        %941 = vmatprep.subr.mxu0 0.0
        %942 = vmatpush1.msra.mxu0 0.0
        %943 = vmatprep.subr.mxu0 0.0
        %944 = vmatpush1.msra.mxu0 0.0
        %945 = vmatprep.subr.mxu0 0.0
        %946 = vmatpush1.msra.mxu0 0.0
        %947 = vmatprep.subr.mxu0 0.0
        %948 = vmatpush1.msra.mxu0 0.0
        %949 = vmatprep.subr.mxu0 0.0
        %950 = vmatpush1.msra.mxu0 0.0
        %951 = vmatprep.subr.mxu0 0.0
        %952 = vmatpush1.msra.mxu0 0.0
        %953 = vmatprep.subr.mxu0 0.0
        %954 = vmatpush1.msra.mxu0 0.0
        %955 = vmatprep.subr.mxu0 0.0
        %956 = vmatpush1.msra.mxu0 0.0
        %957 = vmatprep.subr.mxu0 0.0
        %958 = vmatpush1.msra.mxu0 0.0
        %959 = vmatprep.subr.mxu0 0.0
        %960 = vmatpush1.msra.mxu0 0.0
        %961 = vmatprep.subr.mxu0 0.0
        %962 = vmatpush1.msra.mxu0 0.0
        %963 = vmatprep.subr.mxu0 0.0
        %964 = vmatpush1.msra.mxu0 0.0
        %965 = vmatprep.subr.mxu0 0.0
        %966 = vmatpush1.msra.mxu0 0.0
        %967 = vmatprep.subr.mxu0 0.0
        %968 = vmatpush1.msra.mxu0 0.0
        %969 = vmatprep.subr.mxu0 0.0
        %970 = vmatpush1.msra.mxu0 0.0
        %971 = vmatprep.subr.mxu0 0.0
        %972 = vmatpush1.msra.mxu0 0.0
        %973 = vmatprep.subr.mxu0 0.0
        %974 = vmatpush1.msra.mxu0 0.0
        %975 = vmatprep.subr.mxu0 0.0
        %976 = vmatpush1.msra.mxu0 0.0
        %977 = vmatprep.subr.mxu0 0.0
        %978 = vmatpush1.msra.mxu0 0.0
        %979 = vmatprep.subr.mxu0 0.0
        %980 = vmatpush1.msra.mxu0 0.0
        %981 = vmatprep.subr.mxu0 0.0
        %982 = vmatpush1.msra.mxu0 0.0
        %983 = vmatprep.subr.mxu0 0.0
        %984 = vmatpush1.msra.mxu0 0.0
        %985 = vmatprep.subr.mxu0 0.0
        %986 = vmatpush1.msra.mxu0 0.0
        %987 = vmatprep.subr.mxu0 0.0
        %988 = vmatpush1.msra.mxu0 0.0
        %989 = vmatprep.subr.mxu0 0.0
        %990 = vmatpush1.msra.mxu0 0.0
        %991 = vmatprep.subr.mxu0 0.0
        %992 = vmatpush1.msra.mxu0 0.0
        %993 = vmatprep.subr.mxu0 0.0
        %994 = vmatpush1.msra.mxu0 0.0
        %995 = vmatprep.subr.mxu0 0.0
        %996 = vmatpush1.msra.mxu0 0.0
        %997 = vmatprep.subr.mxu0 0.0
        %998 = vmatpush1.msra.mxu0 0.0
        %999 = vmatprep.subr.mxu0 0.0
        %1000 = vmatpush1.msra.mxu0 0.0
        %1001 = vmatprep.subr.mxu0 0.0
        %1002 = vmatpush1.msra.mxu0 0.0
        %1003 = vmatprep.mubr.f32.mxu0 0.0
        %1004 = vmatmul.mubr.f32.gmra.mrb[0].mxu0 %v937
        %v1005 = vpop.f32.mrb[0].mxu0
        %v1006 = vadd.f32 0.0, %v1005
        %v1007 = vpop.f32.mrb[0].mxu0
        %1008 = vdwg.mxu0
        %1009 = vrot.lane.b32.xlu0 %v422, 64
        %v1010 = vpop.permute.xlu0 %1009
        %v1013 = vsel %vm434, %v780, 0
        %1015 = vmatprep.subr.mxu0 0.0
        %1016 = vmatpush1.msra.mxu0 %v1010
        %1017 = vmatprep.subr.mxu0 0.0
        %1018 = vmatpush1.msra.mxu0 0.0
        %1019 = vmatprep.subr.mxu0 0.0
        %1020 = vmatpush1.msra.mxu0 0.0
        %1021 = vmatprep.subr.mxu0 0.0
        %1022 = vmatpush1.msra.mxu0 0.0
        %1023 = vmatprep.subr.mxu0 0.0
        %1024 = vmatpush1.msra.mxu0 0.0
        %1025 = vmatprep.subr.mxu0 0.0
        %1026 = vmatpush1.msra.mxu0 0.0
        %1027 = vmatprep.subr.mxu0 0.0
        %1028 = vmatpush1.msra.mxu0 0.0
        %1029 = vmatprep.subr.mxu0 0.0
        %1030 = vmatpush1.msra.mxu0 0.0
        %1031 = vmatprep.subr.mxu0 0.0
        %1032 = vmatpush1.msra.mxu0 0.0
        %1033 = vmatprep.subr.mxu0 0.0
        %1034 = vmatpush1.msra.mxu0 0.0
        %1035 = vmatprep.subr.mxu0 0.0
        %1036 = vmatpush1.msra.mxu0 0.0
        %1037 = vmatprep.subr.mxu0 0.0
        %1038 = vmatpush1.msra.mxu0 0.0
        %1039 = vmatprep.subr.mxu0 0.0
        %1040 = vmatpush1.msra.mxu0 0.0
        %1041 = vmatprep.subr.mxu0 0.0
        %1042 = vmatpush1.msra.mxu0 0.0
        %1043 = vmatprep.subr.mxu0 0.0
        %1044 = vmatpush1.msra.mxu0 0.0
        %1045 = vmatprep.subr.mxu0 0.0
        %1046 = vmatpush1.msra.mxu0 0.0
        %1047 = vmatprep.subr.mxu0 0.0
        %1048 = vmatpush1.msra.mxu0 0.0
        %1049 = vmatprep.subr.mxu0 0.0
        %1050 = vmatpush1.msra.mxu0 0.0
        %1051 = vmatprep.subr.mxu0 0.0
        %1052 = vmatpush1.msra.mxu0 0.0
        %1053 = vmatprep.subr.mxu0 0.0
        %1054 = vmatpush1.msra.mxu0 0.0
        %1055 = vmatprep.subr.mxu0 0.0
        %1056 = vmatpush1.msra.mxu0 0.0
        %1057 = vmatprep.subr.mxu0 0.0
        %1058 = vmatpush1.msra.mxu0 0.0
        %1059 = vmatprep.subr.mxu0 0.0
        %1060 = vmatpush1.msra.mxu0 0.0
        %1061 = vmatprep.subr.mxu0 0.0
        %1062 = vmatpush1.msra.mxu0 0.0
        %1063 = vmatprep.subr.mxu0 0.0
        %1064 = vmatpush1.msra.mxu0 0.0
        %1065 = vmatprep.subr.mxu0 0.0
        %1066 = vmatpush1.msra.mxu0 0.0
        %1067 = vmatprep.subr.mxu0 0.0
        %1068 = vmatpush1.msra.mxu0 0.0
        %1069 = vmatprep.subr.mxu0 0.0
        %1070 = vmatpush1.msra.mxu0 0.0
        %1071 = vmatprep.subr.mxu0 0.0
        %1072 = vmatpush1.msra.mxu0 0.0
        %1073 = vmatprep.subr.mxu0 0.0
        %1074 = vmatpush1.msra.mxu0 0.0
        %1075 = vmatprep.subr.mxu0 0.0
        %1076 = vmatpush1.msra.mxu0 0.0
        %1077 = vmatprep.subr.mxu0 0.0
        %1078 = vmatpush1.msra.mxu0 0.0
        %1079 = vmatprep.mubr.f32.mxu0 0.0
        %1080 = vmatmul.mubr.f32.gmra.mrb[0].mxu0 %v1013
        %v1081 = vpop.f32.mrb[0].mxu0
        %v1082 = vadd.f32 0.0, %v1081
        %v1083 = vpop.f32.mrb[0].mxu0
        %1084 = vdwg.mxu0
        %1086 = vrot.lane.b32.xlu0 %v930, 8
        %v1087 = vpop.permute.xlu0 %1086
        %1090 = vrot.lane.b32.xlu0 %v1006, 16
        %v1091 = vpop.permute.xlu0 %1090
        %1094 = vrot.lane.b32.xlu0 %v1082, 24
        %v1095 = vpop.permute.xlu0 %1094
        %v1097 = vsel %vm434, %v854, %v1087
        %vm1098 = vcmask 130048
        %v1099 = vsel %vm1098, %v1097, %v1091
        %vm1100 = vcmask 195584
        %v1101 = vsel %vm1100, %v1099, %v1095
        %v1102 = vld [vmem:[#allocation8] sm:$0xff]
        %v1103 = vld [vmem:[#allocation8 + $0x8] sm:$0xff]
        %v1104 = vld [vmem:[#allocation8 + $0x10] sm:$0xff]
        %v1105 = vld [vmem:[#allocation8 + $0x18] sm:$0xff]
        %v1106 = vld [vmem:[%s5] sm:$0x1]
        %v1108 = vlaneseq
        %v1109 = vshrl.u32 %v1108, 7
        %v1110 = vsub.s32 0, %v1109
        %v1111 = vrot.slane %v1106, %v1110
        %v1114 = vsel %vm342, %v1101, 0
        %1116 = vmatprep.subr.mxu0 0.0
        %1117 = vmatpush1.msra.mxu0 %v1102
        %1118 = vmatprep.subr.mxu0 0.0
        %1119 = vmatpush1.msra.mxu0 %v1103
        %1120 = vmatprep.subr.mxu0 0.0
        %1121 = vmatpush1.msra.mxu0 %v1104
        %1122 = vmatprep.subr.mxu0 0.0
        %1123 = vmatpush1.msra.mxu0 %v1105
        %1124 = vmatprep.subr.mxu0 0.0
        %1125 = vmatpush1.msra.mxu0 0.0
        %1126 = vmatprep.subr.mxu0 0.0
        %1127 = vmatpush1.msra.mxu0 0.0
        %1128 = vmatprep.subr.mxu0 0.0
        %1129 = vmatpush1.msra.mxu0 0.0
        %1130 = vmatprep.subr.mxu0 0.0
        %1131 = vmatpush1.msra.mxu0 0.0
        %1132 = vmatprep.subr.mxu0 0.0
        %1133 = vmatpush1.msra.mxu0 0.0
        %1134 = vmatprep.subr.mxu0 0.0
        %1135 = vmatpush1.msra.mxu0 0.0
        %1136 = vmatprep.subr.mxu0 0.0
        %1137 = vmatpush1.msra.mxu0 0.0
        %1138 = vmatprep.subr.mxu0 0.0
        %1139 = vmatpush1.msra.mxu0 0.0
        %1140 = vmatprep.subr.mxu0 0.0
        %1141 = vmatpush1.msra.mxu0 0.0
        %1142 = vmatprep.subr.mxu0 0.0
        %1143 = vmatpush1.msra.mxu0 0.0
        %1144 = vmatprep.subr.mxu0 0.0
        %1145 = vmatpush1.msra.mxu0 0.0
        %1146 = vmatprep.subr.mxu0 0.0
        %1147 = vmatpush1.msra.mxu0 0.0
        %1148 = vmatprep.subr.mxu0 0.0
        %1149 = vmatpush1.msra.mxu0 0.0
        %1150 = vmatprep.subr.mxu0 0.0
        %1151 = vmatpush1.msra.mxu0 0.0
        %1152 = vmatprep.subr.mxu0 0.0
        %1153 = vmatpush1.msra.mxu0 0.0
        %1154 = vmatprep.subr.mxu0 0.0
        %1155 = vmatpush1.msra.mxu0 0.0
        %1156 = vmatprep.subr.mxu0 0.0
        %1157 = vmatpush1.msra.mxu0 0.0
        %1158 = vmatprep.subr.mxu0 0.0
        %1159 = vmatpush1.msra.mxu0 0.0
        %1160 = vmatprep.subr.mxu0 0.0
        %1161 = vmatpush1.msra.mxu0 0.0
        %1162 = vmatprep.subr.mxu0 0.0
        %1163 = vmatpush1.msra.mxu0 0.0
        %1164 = vmatprep.subr.mxu0 0.0
        %1165 = vmatpush1.msra.mxu0 0.0
        %1166 = vmatprep.subr.mxu0 0.0
        %1167 = vmatpush1.msra.mxu0 0.0
        %1168 = vmatprep.subr.mxu0 0.0
        %1169 = vmatpush1.msra.mxu0 0.0
        %1170 = vmatprep.subr.mxu0 0.0
        %1171 = vmatpush1.msra.mxu0 0.0
        %1172 = vmatprep.subr.mxu0 0.0
        %1173 = vmatpush1.msra.mxu0 0.0
        %1174 = vmatprep.subr.mxu0 0.0
        %1175 = vmatpush1.msra.mxu0 0.0
        %1176 = vmatprep.subr.mxu0 0.0
        %1177 = vmatpush1.msra.mxu0 0.0
        %1178 = vmatprep.subr.mxu0 0.0
        %1179 = vmatpush1.msra.mxu0 0.0
        %1180 = vmatprep.mubr.f32.mxu0 0.0
        %1181 = vmatmul.mubr.f32.gmra.mrb[0].mxu0 %v1114
        %v1182 = vpop.f32.mrb[0].mxu0
        %v1183 = vadd.f32 %v1111, %v1182
        %v1184 = vpop.f32.mrb[0].mxu0
        %1185 = vdwg.mxu0
        %1186 = vst.msk [vmem:[%s329] sm:$0xff] %vm342, %v1183
        %s1187 = sand.u32 %s171, 1
        %s1188 = scalar_lea.sflag [#allocation4], %s1187
        %s1189 = sand.u32 %s171, 1
        %s1190 = smul.addr %s1189, 8
        %s1191 = scalar_lea.vmem [#allocation10], %s1190
        // Predicated region
        $region61: #{tpu_custom_call.1} parent=43 // pred_check
          %p1192 = pneg %p181
        $region62: #{tpu_custom_call.1} parent=43 // pred_check_branch
          %1194 = sbr.rel (%p1192) target = $region64
        $region63: #{tpu_custom_call.1} parent=43 // pred_region
          %s1196 = ssub.s32 128, 128
          %1197 = vsyncadd %s1188, %s1196
          %s1198 = smul.addr %s27, 128
          %s1199 = scalar_lea.hbm %s6, %s1198
          %s1201 = sshll.u32 %s1191, 4
          %s1202 = int_to_ptr.vmem [resolvable:$true] %s1201
          %1204 = dma.vmem_to_hbm [thread:$0]  %s1202, 128, %s1199, %s1188
        $region64: #{tpu_custom_call.1} parent=43 // pred_fallthru
          _
      $region44: #{tpu_custom_call.1} parent=5 // pred_fallthru
        _
      %p1205 = scmp.le.s32.totalorder 2, %s22
      // Predicated region
      $region65: #{tpu_custom_call.1} parent=5 // pred_check
        %p1206 = pneg %p1205
      $region66: #{tpu_custom_call.1} parent=5 // pred_check_branch
        %1208 = sbr.rel (%p1206) target = $region68
      $region67: #{tpu_custom_call.1} parent=5 // pred_region
        %s1209 = ssub.s32 %s22, 2
        // Predicated region
        $region69: #{tpu_custom_call.1} parent=67 // pred_check
          %p1210 = pneg %p187
        $region70: #{tpu_custom_call.1} parent=67 // pred_check_branch
          %1212 = sbr.rel (%p1210) target = $region72
        $region71: #{tpu_custom_call.1} parent=67 // pred_region
          %s1213 = sand.u32 %s172, 1
          %s1214 = scalar_lea.sflag [#allocation4], %s1213
          %s1215 = sand.u32 %s172, 1
          %s1216 = smul.addr %s1215, 8
          %s1217 = scalar_lea.vmem [#allocation10], %s1216
          %1218 = dma.done %s1214, 128
        $region72: #{tpu_custom_call.1} parent=67 // pred_fallthru
          _
      $region68: #{tpu_custom_call.1} parent=5 // pred_fallthru
        _
    $region6: #{tpu_custom_call.1} parent=1 // loop_footer
      %s26 = sadd.s32 1, %s22
    $region7: #{tpu_custom_call.1} parent=1 // loop_footer_branch
      %21 = sbr.rel target = $region3
    $region8: #{tpu_custom_call.1} parent=1 // loop_exit
      _
    %1219 = vsyncpa [#allocation3], 1
    %s1220 = scalar_lea.sflag [#allocation3], 1
    %1221 = vsyncpa %s1220, 1
    %1222 = vsyncpa [#allocation6], 1
    %s1223 = scalar_lea.sflag [#allocation6], 1
    %1224 = vsyncpa %s1223, 1
    %1225 = vsyncpa [#allocation9], 1
    %1226 = vsyncpa [#allocation4], 1
    %s1227 = scalar_lea.sflag [#allocation4], 1
    %1228 = vsyncpa %s1227, 1

</llo_original>
